<compile_context>
chip_gen: v7x
topology: tpu7x:2x2x1
jax: 0.10.0
libtpu: 0.0.40
codegen_flags: <defaults>
</compile_context>

<pallas_src>
import math
import numpy as np
import jax
import jax.numpy as jnp
from jax.experimental import pallas as pl
from jax.experimental.pallas import tpu as pltpu

HID_CH = 10          # hidden_channels
HID_D = 10           # hidden_dims
KTAPS = 9            # 3x3 kernel taps
N_POS = 16           # distinct conv output positions (4x4 torus)
N_POS_FULL = 36      # full 6x6 conv output positions
OUT_D = 1            # fc3 output features
EPS = 1e-5           # PyTorch LayerNorm default eps


def _layernorm(z, g, b):
    mu = jnp.mean(z, axis=-1, keepdims=True)
    var = jnp.mean((z - mu) ** 2, axis=-1, keepdims=True)
    return (z - mu) * jax.lax.rsqrt(var + EPS) * g + b


def cnn_pbm_kernel(x_ref, a_ref, bconv_ref,
                   w1_ref, b1_ref, g1_ref, be1_ref,
                   w2_ref, b2_ref, g2_ref, be2_ref,
                   w3_ref, b3_ref, out_ref):
    x = x_ref[...]                                                     # (TB, 16)

    # conv1 (circular) over all channels / distinct positions + bias + ReLU,
    # as a single MXU matmul against the wrapper-folded matrix A.
    h = jnp.dot(x, a_ref[...], preferred_element_type=jnp.float32)    # (TB, 160)
    h = jnp.maximum(h + bconv_ref[...], 0.0)

    # fc1 (duplicate 6x6 positions folded into W1fold) + ln1 + relu
    z = jnp.dot(h, w1_ref[...], preferred_element_type=jnp.float32) + b1_ref[...]
    z = jnp.maximum(_layernorm(z, g1_ref[...], be1_ref[...]), 0.0)

    # fc2 + ln2 + relu
    z = jnp.dot(z, w2_ref[...], preferred_element_type=jnp.float32) + b2_ref[...]
    z = jnp.maximum(_layernorm(z, g2_ref[...], be2_ref[...]), 0.0)

    # fc3 (out_features = 1): lane-reduce instead of an N=1 matmul.
    out_ref[...] = jnp.sum(z * w3_ref[...], axis=-1, keepdims=True) + b3_ref[...]


def _build_conv_matrix(conv_w):
    """A[q, c*16 + p]: contribution of raw-input pixel q to channel c, distinct position p."""
    wc = conv_w.reshape(HID_CH, KTAPS)                                 # (C, 9), k = ki*3+kj
    m = np.zeros((16, KTAPS, N_POS), np.float32)
    for i in range(4):
        for j in range(4):
            p = i * 4 + j
            for ki in range(3):
                for kj in range(3):
                    q = ((i + ki - 2) % 4) * 4 + ((j + kj - 2) % 4)    # circular pad=2
                    m[q, ki * 3 + kj, p] = 1.0
    a = jnp.einsum("qkp,ck->qcp", jnp.asarray(m), wc)
    return a.reshape(16, HID_CH * N_POS)                               # (16, 160)


def _fold_fc1(fc1_w):
    """Fold fc1 rows of duplicate 6x6 positions onto the 16 distinct positions."""
    f = np.zeros((N_POS_FULL, N_POS), np.float32)
    for i6 in range(6):
        for j6 in range(6):
            f[i6 * 6 + j6, (i6 % 4) * 4 + (j6 % 4)] = 1.0
    w = fc1_w.reshape(HID_D, HID_CH, N_POS_FULL)                       # (D, C, 36)
    w1 = jnp.einsum("dcm,mp->cpd", w, jnp.asarray(f))
    return w1.reshape(HID_CH * N_POS, HID_D)                           # (160, D)


def _round_up(n, m):
    return ((n + m - 1) // m) * m


def cnn_pbm_forward(x, params, *, batch_tile=4096):
    """x: (B, 1, 4, 4) float32, NCHW like PyTorch."""
    B = x.shape[0]
    assert x.shape[1:] == (1, 4, 4)
    x_flat = x.reshape(B, 16).astype(jnp.float32)                      # 64 B/sample HBM read

    a = _build_conv_matrix(params["conv_w"].astype(jnp.float32))       # (16, 160)
    bconv = jnp.repeat(params["conv_b"].astype(jnp.float32), N_POS).reshape(1, HID_CH * N_POS)
    w1 = _fold_fc1(params["fc1_w"].astype(jnp.float32))                # (160, 10)
    w2 = params["fc2_w"].astype(jnp.float32).T                         # (10, 10)
    w3 = params["fc3_w"].astype(jnp.float32).reshape(1, HID_D)         # (1, 10)
    b1 = params["fc1_b"].reshape(1, HID_D).astype(jnp.float32)
    b2 = params["fc2_b"].reshape(1, HID_D).astype(jnp.float32)
    b3 = params["fc3_b"].reshape(1, OUT_D).astype(jnp.float32)
    g1 = params["ln1_g"].reshape(1, HID_D).astype(jnp.float32)
    be1 = params["ln1_b"].reshape(1, HID_D).astype(jnp.float32)
    g2 = params["ln2_g"].reshape(1, HID_D).astype(jnp.float32)
    be2 = params["ln2_b"].reshape(1, HID_D).astype(jnp.float32)

    # Batch tiling: TB rows per grid step (sublane-aligned), pad batch up to a multiple.
    tb = batch_tile if B >= batch_tile else _round_up(B, 8)
    b_pad = _round_up(B, tb)
    if b_pad != B:
        x_flat = jnp.pad(x_flat, ((0, b_pad - B), (0, 0)))

    def const_spec(arr):
        shp = arr.shape
        return pl.BlockSpec(shp, lambda i: (0,) * len(shp))

    in_specs = [
        pl.BlockSpec((tb, 16), lambda i: (i, 0)),   # x tile
        const_spec(a), const_spec(bconv),
        const_spec(w1), const_spec(b1), const_spec(g1), const_spec(be1),
        const_spec(w2), const_spec(b2), const_spec(g2), const_spec(be2),
        const_spec(w3), const_spec(b3),
    ]
    out_specs = pl.BlockSpec((tb, OUT_D), lambda i: (i, 0))

    out = pl.pallas_call(
        cnn_pbm_kernel,
        out_shape=jax.ShapeDtypeStruct((b_pad, OUT_D), jnp.float32),
        grid_spec=pltpu.PrefetchScalarGridSpec(
            num_scalar_prefetch=0,
            grid=(b_pad // tb,),
            in_specs=in_specs,
            out_specs=out_specs,
        ),
        compiler_params=pltpu.CompilerParams(
            dimension_semantics=("parallel",),      # lets v7x shard batch over both TCs
        ),
    )(x_flat, a, bconv, w1, b1, g1, be1, w2, b2, g2, be2, w3, b3)
    return out[:B]


def cnn_pbm_reference(x, params):
    """Pure-JAX reference matching the PyTorch forward exactly (unfolded 6x6 conv)."""
    B = x.shape[0]
    x2d = x[:, 0]
    xpad = jnp.pad(x2d, ((0, 0), (2, 2), (2, 2)), mode="wrap")         # circular pad=2
    wc = params["conv_w"]                                              # (C, 1, 3, 3)
    conv = jnp.zeros((B, HID_CH, 6, 6), jnp.float32)
    for ki in range(3):
        for kj in range(3):
            w_kk = wc[:, 0, ki, kj]
            conv = conv + xpad[:, None, ki:ki + 6, kj:kj + 6] * w_kk[None, :, None, None]
    conv = conv + params["conv_b"][None, :, None, None]
    h = jax.nn.relu(conv).reshape(B, -1)                               # (B, C*36)

    def ln(z, g, b):
        mu = z.mean(-1, keepdims=True)
        var = ((z - mu) ** 2).mean(-1, keepdims=True)
        return (z - mu) / jnp.sqrt(var + EPS) * g + b

    z = h @ params["fc1_w"].T + params["fc1_b"]
    z = jax.nn.relu(ln(z, params["ln1_g"], params["ln1_b"]))
    z = z @ params["fc2_w"].T + params["fc2_b"]
    z = jax.nn.relu(ln(z, params["ln2_g"], params["ln2_b"]))
    return z @ params["fc3_w"].T + params["fc3_b"]


def init_params(key):
    keys = jax.random.split(key, 12)

    def u(k, shape, fan_in):
        b = 1.0 / math.sqrt(fan_in)
        return jax.random.uniform(k, shape, jnp.float32, -b, b)

    p = {}
    p["conv_w"] = u(keys[0], (HID_CH, 1, 3, 3), 9)
    p["conv_b"] = u(keys[1], (HID_CH,), 9)
    p["fc1_w"] = u(keys[2], (HID_D, HID_CH * N_POS_FULL), HID_CH * N_POS_FULL)
    p["fc1_b"] = u(keys[3], (HID_D,), HID_CH * N_POS_FULL)
    p["fc2_w"] = u(keys[4], (HID_D, HID_D), HID_D)
    p["fc2_b"] = u(keys[5], (HID_D,), HID_D)
    p["fc3_w"] = u(keys[6], (OUT_D, HID_D), HID_D)
    p["fc3_b"] = u(keys[7], (OUT_D,), HID_D)
    # PyTorch inits LayerNorm to gamma=1, beta=0; perturb deterministically so the
    # affine path is actually exercised.
    p["ln1_g"] = 1.0 + 0.1 * jax.random.normal(keys[8], (HID_D,), jnp.float32)
    p["ln1_b"] = 0.1 * jax.random.normal(keys[9], (HID_D,), jnp.float32)
    p["ln2_g"] = 1.0 + 0.1 * jax.random.normal(keys[10], (HID_D,), jnp.float32)
    p["ln2_b"] = 0.1 * jax.random.normal(keys[11], (HID_D,), jnp.float32)
    return p


if __name__ == "__main__":
    key = jax.random.PRNGKey(0)
    pkey, xkey, xkey2 = jax.random.split(key, 3)
    params = init_params(pkey)

    # Small shape consistent with the module (fc1 expects C*6*6 with pad=2 -> input 4x4).
    x = jax.random.normal(xkey, (2, 1, 4, 4), jnp.float32)             # NCHW, as in PyTorch
    out = jax.block_until_ready(cnn_pbm_forward(x, params))
    ref = cnn_pbm_reference(x, params)
    assert out.shape == (2, OUT_D)
    if not jnp.allclose(out, ref, atol=1e-4, rtol=1e-4):
        raise AssertionError(f"kernel/reference mismatch (B=2):\n{out}\nvs\n{ref}")

    # Exercise the multi-step batch grid + padding path.
    x_big = jax.random.normal(xkey2, (300, 1, 4, 4), jnp.float32)
    out_big = jax.block_until_ready(cnn_pbm_forward(x_big, params, batch_tile=128))
    ref_big = cnn_pbm_reference(x_big, params)
    assert out_big.shape == (300, OUT_D)
    if not jnp.allclose(out_big, ref_big, atol=1e-4, rtol=1e-4):
        raise AssertionError("kernel/reference mismatch (B=300, gridded)")

    print("KERNEL_OK")
</pallas_src>

<mosaic_0001>
module attributes {stable_mosaic.version = 11 : i64} {
  func.func @cnn_pbm_kernel(%arg0: i32, %arg1: memref<8x16xf32, #tpu.memory_space<vmem>>, %arg2: memref<16x160xf32, #tpu.memory_space<vmem>>, %arg3: memref<1x160xf32, #tpu.memory_space<vmem>>, %arg4: memref<160x10xf32, #tpu.memory_space<vmem>>, %arg5: memref<1x10xf32, #tpu.memory_space<vmem>>, %arg6: memref<1x10xf32, #tpu.memory_space<vmem>>, %arg7: memref<1x10xf32, #tpu.memory_space<vmem>>, %arg8: memref<10x10xf32, #tpu.memory_space<vmem>>, %arg9: memref<1x10xf32, #tpu.memory_space<vmem>>, %arg10: memref<1x10xf32, #tpu.memory_space<vmem>>, %arg11: memref<1x10xf32, #tpu.memory_space<vmem>>, %arg12: memref<1x10xf32, #tpu.memory_space<vmem>>, %arg13: memref<1x1xf32, #tpu.memory_space<vmem>>, %arg14: memref<8x1xf32, #tpu.memory_space<vmem>>) attributes {dimension_semantics = [#tpu.dimension_semantics<parallel>], iteration_bounds = array<i64: 1>, scalar_prefetch = 0 : i64, scratch_operands = 0 : i64, tpu.core_type = #tpu.core_type<tc>, window_params = [{transform_indices = @transform_0, window_bounds = array<i64: 8, 16>}, {pipeline_mode = #tpu.pipeline_mode<synchronous>, transform_indices = @transform_1, window_bounds = array<i64: 16, 160>}, {pipeline_mode = #tpu.pipeline_mode<synchronous>, transform_indices = @transform_2, window_bounds = array<i64: 1, 160>}, {pipeline_mode = #tpu.pipeline_mode<synchronous>, transform_indices = @transform_3, window_bounds = array<i64: 160, 10>}, {pipeline_mode = #tpu.pipeline_mode<synchronous>, transform_indices = @transform_4, window_bounds = array<i64: 1, 10>}, {pipeline_mode = #tpu.pipeline_mode<synchronous>, transform_indices = @transform_5, window_bounds = array<i64: 1, 10>}, {pipeline_mode = #tpu.pipeline_mode<synchronous>, transform_indices = @transform_6, window_bounds = array<i64: 1, 10>}, {pipeline_mode = #tpu.pipeline_mode<synchronous>, transform_indices = @transform_7, window_bounds = array<i64: 10, 10>}, {pipeline_mode = #tpu.pipeline_mode<synchronous>, transform_indices = @transform_8, window_bounds = array<i64: 1, 10>}, {pipeline_mode = #tpu.pipeline_mode<synchronous>, transform_indices = @transform_9, window_bounds = array<i64: 1, 10>}, {pipeline_mode = #tpu.pipeline_mode<synchronous>, transform_indices = @transform_10, window_bounds = array<i64: 1, 10>}, {pipeline_mode = #tpu.pipeline_mode<synchronous>, transform_indices = @transform_11, window_bounds = array<i64: 1, 10>}, {pipeline_mode = #tpu.pipeline_mode<synchronous>, transform_indices = @transform_12, window_bounds = array<i64: 1, 1>}, {transform_indices = @transform_13, window_bounds = array<i64: 8, 1>}]} {
    %c0 = arith.constant 0 : index
    %c0_0 = arith.constant 0 : index
    %0 = vector.load %arg1[%c0, %c0_0] : memref<8x16xf32, #tpu.memory_space<vmem>>, vector<8x16xf32>
    %c0_1 = arith.constant 0 : index
    %c0_2 = arith.constant 0 : index
    %1 = vector.load %arg2[%c0_1, %c0_2] : memref<16x160xf32, #tpu.memory_space<vmem>>, vector<16x160xf32>
    %cst = arith.constant dense<0.000000e+00> : vector<8x160xf32>
    %2 = tpu.matmul %0, %1, %cst {dimension_numbers = #tpu.dot_dimension_numbers<[1], [0], [0], [1], [0, 0, 1, 1], [], []>} : vector<8x16xf32>, vector<16x160xf32>, vector<8x160xf32> -> vector<8x160xf32>
    %c0_3 = arith.constant 0 : index
    %c0_4 = arith.constant 0 : index
    %3 = vector.load %arg3[%c0_3, %c0_4] : memref<1x160xf32, #tpu.memory_space<vmem>>, vector<1x160xf32>
    %4 = vector.broadcast %3 : vector<1x160xf32> to vector<8x160xf32>
    %5 = arith.addf %2, %4 : vector<8x160xf32>
    %cst_5 = arith.constant 0.000000e+00 : f32
    %6 = vector.broadcast %cst_5 : f32 to vector<8x160xf32>
    %7 = arith.maximumf %5, %6 : vector<8x160xf32>
    %c0_6 = arith.constant 0 : index
    %c0_7 = arith.constant 0 : index
    %8 = vector.load %arg4[%c0_6, %c0_7] : memref<160x10xf32, #tpu.memory_space<vmem>>, vector<160x10xf32>
    %cst_8 = arith.constant dense<0.000000e+00> : vector<8x10xf32>
    %9 = tpu.matmul %7, %8, %cst_8 {dimension_numbers = #tpu.dot_dimension_numbers<[1], [0], [0], [1], [0, 0, 1, 1], [], []>} : vector<8x160xf32>, vector<160x10xf32>, vector<8x10xf32> -> vector<8x10xf32>
    %c0_9 = arith.constant 0 : index
    %c0_10 = arith.constant 0 : index
    %10 = vector.load %arg5[%c0_9, %c0_10] : memref<1x10xf32, #tpu.memory_space<vmem>>, vector<1x10xf32>
    %11 = vector.broadcast %10 : vector<1x10xf32> to vector<8x10xf32>
    %12 = arith.addf %9, %11 : vector<8x10xf32>
    %c0_11 = arith.constant 0 : index
    %c0_12 = arith.constant 0 : index
    %13 = vector.load %arg6[%c0_11, %c0_12] : memref<1x10xf32, #tpu.memory_space<vmem>>, vector<1x10xf32>
    %c0_13 = arith.constant 0 : index
    %c0_14 = arith.constant 0 : index
    %14 = vector.load %arg7[%c0_13, %c0_14] : memref<1x10xf32, #tpu.memory_space<vmem>>, vector<1x10xf32>
    %cst_15 = arith.constant dense<0.000000e+00> : vector<8xf32>
    %15 = vector.multi_reduction <add>, %12, %cst_15 [1] : vector<8x10xf32> to vector<8xf32>
    %16 = vector.shape_cast %15 : vector<8xf32> to vector<8x1xf32>
    %cst_16 = arith.constant 1.000000e+01 : f32
    %17 = vector.broadcast %cst_16 : f32 to vector<8x1xf32>
    %18 = arith.divf %16, %17 : vector<8x1xf32>
    %19 = vector.broadcast %18 : vector<8x1xf32> to vector<8x10xf32>
    %20 = arith.subf %12, %19 : vector<8x10xf32>
    %21 = arith.mulf %20, %20 : vector<8x10xf32>
    %cst_17 = arith.constant dense<0.000000e+00> : vector<8xf32>
    %22 = vector.multi_reduction <add>, %21, %cst_17 [1] : vector<8x10xf32> to vector<8xf32>
    %23 = vector.shape_cast %22 : vector<8xf32> to vector<8x1xf32>
    %cst_18 = arith.constant 1.000000e+01 : f32
    %24 = vector.broadcast %cst_18 : f32 to vector<8x1xf32>
    %25 = arith.divf %23, %24 : vector<8x1xf32>
    %26 = vector.broadcast %18 : vector<8x1xf32> to vector<8x10xf32>
    %27 = arith.subf %12, %26 : vector<8x10xf32>
    %cst_19 = arith.constant 9.99999974E-6 : f32
    %28 = vector.broadcast %cst_19 : f32 to vector<8x1xf32>
    %29 = arith.addf %25, %28 : vector<8x1xf32>
    %30 = math.rsqrt %29 : vector<8x1xf32>
    %31 = vector.broadcast %30 : vector<8x1xf32> to vector<8x10xf32>
    %32 = arith.mulf %27, %31 : vector<8x10xf32>
    %33 = vector.broadcast %13 : vector<1x10xf32> to vector<8x10xf32>
    %34 = arith.mulf %32, %33 : vector<8x10xf32>
    %35 = vector.broadcast %14 : vector<1x10xf32> to vector<8x10xf32>
    %36 = arith.addf %34, %35 : vector<8x10xf32>
    %cst_20 = arith.constant 0.000000e+00 : f32
    %37 = vector.broadcast %cst_20 : f32 to vector<8x10xf32>
    %38 = arith.maximumf %36, %37 : vector<8x10xf32>
    %c0_21 = arith.constant 0 : index
    %c0_22 = arith.constant 0 : index
    %39 = vector.load %arg8[%c0_21, %c0_22] : memref<10x10xf32, #tpu.memory_space<vmem>>, vector<10x10xf32>
    %cst_23 = arith.constant dense<0.000000e+00> : vector<8x10xf32>
    %40 = tpu.matmul %38, %39, %cst_23 {dimension_numbers = #tpu.dot_dimension_numbers<[1], [0], [0], [1], [0, 0, 1, 1], [], []>} : vector<8x10xf32>, vector<10x10xf32>, vector<8x10xf32> -> vector<8x10xf32>
    %c0_24 = arith.constant 0 : index
    %c0_25 = arith.constant 0 : index
    %41 = vector.load %arg9[%c0_24, %c0_25] : memref<1x10xf32, #tpu.memory_space<vmem>>, vector<1x10xf32>
    %42 = vector.broadcast %41 : vector<1x10xf32> to vector<8x10xf32>
    %43 = arith.addf %40, %42 : vector<8x10xf32>
    %c0_26 = arith.constant 0 : index
    %c0_27 = arith.constant 0 : index
    %44 = vector.load %arg10[%c0_26, %c0_27] : memref<1x10xf32, #tpu.memory_space<vmem>>, vector<1x10xf32>
    %c0_28 = arith.constant 0 : index
    %c0_29 = arith.constant 0 : index
    %45 = vector.load %arg11[%c0_28, %c0_29] : memref<1x10xf32, #tpu.memory_space<vmem>>, vector<1x10xf32>
    %cst_30 = arith.constant dense<0.000000e+00> : vector<8xf32>
    %46 = vector.multi_reduction <add>, %43, %cst_30 [1] : vector<8x10xf32> to vector<8xf32>
    %47 = vector.shape_cast %46 : vector<8xf32> to vector<8x1xf32>
    %cst_31 = arith.constant 1.000000e+01 : f32
    %48 = vector.broadcast %cst_31 : f32 to vector<8x1xf32>
    %49 = arith.divf %47, %48 : vector<8x1xf32>
    %50 = vector.broadcast %49 : vector<8x1xf32> to vector<8x10xf32>
    %51 = arith.subf %43, %50 : vector<8x10xf32>
    %52 = arith.mulf %51, %51 : vector<8x10xf32>
    %cst_32 = arith.constant dense<0.000000e+00> : vector<8xf32>
    %53 = vector.multi_reduction <add>, %52, %cst_32 [1] : vector<8x10xf32> to vector<8xf32>
    %54 = vector.shape_cast %53 : vector<8xf32> to vector<8x1xf32>
    %cst_33 = arith.constant 1.000000e+01 : f32
    %55 = vector.broadcast %cst_33 : f32 to vector<8x1xf32>
    %56 = arith.divf %54, %55 : vector<8x1xf32>
    %57 = vector.broadcast %49 : vector<8x1xf32> to vector<8x10xf32>
    %58 = arith.subf %43, %57 : vector<8x10xf32>
    %cst_34 = arith.constant 9.99999974E-6 : f32
    %59 = vector.broadcast %cst_34 : f32 to vector<8x1xf32>
    %60 = arith.addf %56, %59 : vector<8x1xf32>
    %61 = math.rsqrt %60 : vector<8x1xf32>
    %62 = vector.broadcast %61 : vector<8x1xf32> to vector<8x10xf32>
    %63 = arith.mulf %58, %62 : vector<8x10xf32>
    %64 = vector.broadcast %44 : vector<1x10xf32> to vector<8x10xf32>
    %65 = arith.mulf %63, %64 : vector<8x10xf32>
    %66 = vector.broadcast %45 : vector<1x10xf32> to vector<8x10xf32>
    %67 = arith.addf %65, %66 : vector<8x10xf32>
    %cst_35 = arith.constant 0.000000e+00 : f32
    %68 = vector.broadcast %cst_35 : f32 to vector<8x10xf32>
    %69 = arith.maximumf %67, %68 : vector<8x10xf32>
    %c0_36 = arith.constant 0 : index
    %c0_37 = arith.constant 0 : index
    %70 = vector.load %arg12[%c0_36, %c0_37] : memref<1x10xf32, #tpu.memory_space<vmem>>, vector<1x10xf32>
    %71 = vector.broadcast %70 : vector<1x10xf32> to vector<8x10xf32>
    %72 = arith.mulf %69, %71 : vector<8x10xf32>
    %cst_38 = arith.constant dense<0.000000e+00> : vector<8xf32>
    %73 = vector.multi_reduction <add>, %72, %cst_38 [1] : vector<8x10xf32> to vector<8xf32>
    %74 = vector.shape_cast %73 : vector<8xf32> to vector<8x1xf32>
    %c0_39 = arith.constant 0 : index
    %c0_40 = arith.constant 0 : index
    %75 = vector.load %arg13[%c0_39, %c0_40] : memref<1x1xf32, #tpu.memory_space<vmem>>, vector<1x1xf32>
    %76 = vector.broadcast %75 : vector<1x1xf32> to vector<8x1xf32>
    %77 = arith.addf %74, %76 : vector<8x1xf32>
    %c0_41 = arith.constant 0 : index
    %c0_42 = arith.constant 0 : index
    %78 = vector.load %arg14[%c0_41, %c0_42] : memref<8x1xf32, #tpu.memory_space<vmem>>, vector<8x1xf32>
    tpu.vector_store %arg14[%c0_41, %c0_42], %77 {strides = array<i32>} : memref<8x1xf32, #tpu.memory_space<vmem>>, vector<8x1xf32>,
    return
  }
  func.func @transform_0(%arg0: i32) -> (i32, i32) {
    %c0_i32 = arith.constant 0 : i32
    %c0_i32_0 = arith.constant 0 : i32
    return %arg0, %c0_i32 : i32, i32
  }
  func.func @transform_1(%arg0: i32) -> (i32, i32) {
    %c0_i32 = arith.constant 0 : i32
    %c0_i32_0 = arith.constant 0 : i32
    %c0_i32_1 = arith.constant 0 : i32
    return %c0_i32, %c0_i32_0 : i32, i32
  }
  func.func @transform_2(%arg0: i32) -> (i32, i32) {
    %c0_i32 = arith.constant 0 : i32
    %c0_i32_0 = arith.constant 0 : i32
    %c0_i32_1 = arith.constant 0 : i32
    return %c0_i32, %c0_i32_0 : i32, i32
  }
  func.func @transform_3(%arg0: i32) -> (i32, i32) {
    %c0_i32 = arith.constant 0 : i32
    %c0_i32_0 = arith.constant 0 : i32
    %c0_i32_1 = arith.constant 0 : i32
    return %c0_i32, %c0_i32_0 : i32, i32
  }
  func.func @transform_4(%arg0: i32) -> (i32, i32) {
    %c0_i32 = arith.constant 0 : i32
    %c0_i32_0 = arith.constant 0 : i32
    %c0_i32_1 = arith.constant 0 : i32
    return %c0_i32, %c0_i32_0 : i32, i32
  }
  func.func @transform_5(%arg0: i32) -> (i32, i32) {
    %c0_i32 = arith.constant 0 : i32
    %c0_i32_0 = arith.constant 0 : i32
    %c0_i32_1 = arith.constant 0 : i32
    return %c0_i32, %c0_i32_0 : i32, i32
  }
  func.func @transform_6(%arg0: i32) -> (i32, i32) {
    %c0_i32 = arith.constant 0 : i32
    %c0_i32_0 = arith.constant 0 : i32
    %c0_i32_1 = arith.constant 0 : i32
    return %c0_i32, %c0_i32_0 : i32, i32
  }
  func.func @transform_7(%arg0: i32) -> (i32, i32) {
    %c0_i32 = arith.constant 0 : i32
    %c0_i32_0 = arith.constant 0 : i32
    %c0_i32_1 = arith.constant 0 : i32
    return %c0_i32, %c0_i32_0 : i32, i32
  }
  func.func @transform_8(%arg0: i32) -> (i32, i32) {
    %c0_i32 = arith.constant 0 : i32
    %c0_i32_0 = arith.constant 0 : i32
    %c0_i32_1 = arith.constant 0 : i32
    return %c0_i32, %c0_i32_0 : i32, i32
  }
  func.func @transform_9(%arg0: i32) -> (i32, i32) {
    %c0_i32 = arith.constant 0 : i32
    %c0_i32_0 = arith.constant 0 : i32
    %c0_i32_1 = arith.constant 0 : i32
    return %c0_i32, %c0_i32_0 : i32, i32
  }
  func.func @transform_10(%arg0: i32) -> (i32, i32) {
    %c0_i32 = arith.constant 0 : i32
    %c0_i32_0 = arith.constant 0 : i32
    %c0_i32_1 = arith.constant 0 : i32
    return %c0_i32, %c0_i32_0 : i32, i32
  }
  func.func @transform_11(%arg0: i32) -> (i32, i32) {
    %c0_i32 = arith.constant 0 : i32
    %c0_i32_0 = arith.constant 0 : i32
    %c0_i32_1 = arith.constant 0 : i32
    return %c0_i32, %c0_i32_0 : i32, i32
  }
  func.func @transform_12(%arg0: i32) -> (i32, i32) {
    %c0_i32 = arith.constant 0 : i32
    %c0_i32_0 = arith.constant 0 : i32
    %c0_i32_1 = arith.constant 0 : i32
    return %c0_i32, %c0_i32_0 : i32, i32
  }
  func.func @transform_13(%arg0: i32) -> (i32, i32) {
    %c0_i32 = arith.constant 0 : i32
    %c0_i32_0 = arith.constant 0 : i32
    return %arg0, %c0_i32 : i32, i32
  }
}

</mosaic_0001>

<llo_original>
// kernel: tpu_custom_call.1
$region0: #{tpu_custom_call.1}
  #allocation0 [shape = 'u32[]', space=smem, size = 0x4, offset = 0x4, fixed_abs, tag = 'smem constant byte address 0x4 - core index']
  #allocation1 [shape = 'u32[144,128]{1,0:T(1,128)}', space=vmem, size = 0x12000, scoped, tag = 'internal scratch']
  #allocation2 [shape = 'f32[1,1]{1,0:T(1,128)S(1)}', space=vmem, size = 0x200, scoped, tag = 'scoped memory for tpu_custom_call.1']
  %s0 = inlined_call_operand.vmem [shape: f32[8,16], index: 0, kind: input, shape index: {}]
  %s1 = inlined_call_operand.vmem [shape: f32[16,160], index: 1, kind: input, shape index: {}]
  %s2 = inlined_call_operand.vmem [shape: f32[1,160], index: 2, kind: input, shape index: {}]
  %s3 = inlined_call_operand.vmem [shape: f32[160,10], index: 3, kind: input, shape index: {}]
  %s4 = inlined_call_operand.vmem [shape: f32[1,10], index: 4, kind: input, shape index: {}]
  %s5 = inlined_call_operand.vmem [shape: f32[1,10], index: 5, kind: input, shape index: {}]
  %s6 = inlined_call_operand.vmem [shape: f32[1,10], index: 6, kind: input, shape index: {}]
  %s7 = inlined_call_operand.vmem [shape: f32[10,10], index: 7, kind: input, shape index: {}]
  %s8 = inlined_call_operand.vmem [shape: f32[1,10], index: 8, kind: input, shape index: {}]
  %s9 = inlined_call_operand.vmem [shape: f32[1,10], index: 9, kind: input, shape index: {}]
  %s10 = inlined_call_operand.vmem [shape: f32[1,10], index: 10, kind: input, shape index: {}]
  %s11 = inlined_call_operand.vmem [shape: f32[1,10], index: 11, kind: input, shape index: {}]
  %s12 = inlined_call_operand.<no memory space> [shape: f32[1,1], index: 12, kind: input, shape index: {}]
  %s13 = inlined_call_operand.vmem [shape: f32[8,1], index: 13, kind: output, shape index: {}]
  %s14 = sld [smem:[#allocation0]]
  $region62: #{tpu_custom_call.1} parent=0
    _
  %s16 = ssub.s32 1, %s14
  %s17 = scalar_select 0, %s16, %s14
  %v18 = vstv %s12
  %19 = vst [vmem:[#allocation2] sm:$0x1] %v18
  // Predicated region
  $region2: #{tpu_custom_call.1} parent=0 // pred_check
    _
  $region3: #{tpu_custom_call.1} parent=0 // pred_check_branch
    %21 = sbr.rel (0) target = $region5
  $region4: #{tpu_custom_call.1} parent=0 // pred_region
    _
  $region5: #{tpu_custom_call.1} parent=0 // pred_fallthru
    _
  // Predicated region
  $region6: #{tpu_custom_call.1} parent=0 // pred_check
    _
  $region7: #{tpu_custom_call.1} parent=0 // pred_check_branch
    %23 = sbr.rel (0) target = $region9
  $region8: #{tpu_custom_call.1} parent=0 // pred_region
    _
  $region9: #{tpu_custom_call.1} parent=0 // pred_fallthru
    _
  // Predicated region
  $region10: #{tpu_custom_call.1} parent=0 // pred_check
    _
  $region11: #{tpu_custom_call.1} parent=0 // pred_check_branch
    %25 = sbr.rel (0) target = $region13
  $region12: #{tpu_custom_call.1} parent=0 // pred_region
    _
  $region13: #{tpu_custom_call.1} parent=0 // pred_fallthru
    _
  // Predicated region
  $region14: #{tpu_custom_call.1} parent=0 // pred_check
    _
  $region15: #{tpu_custom_call.1} parent=0 // pred_check_branch
    %27 = sbr.rel (0) target = $region17
  $region16: #{tpu_custom_call.1} parent=0 // pred_region
    _
  $region17: #{tpu_custom_call.1} parent=0 // pred_fallthru
    _
  // Predicated region
  $region18: #{tpu_custom_call.1} parent=0 // pred_check
    _
  $region19: #{tpu_custom_call.1} parent=0 // pred_check_branch
    %29 = sbr.rel (0) target = $region21
  $region20: #{tpu_custom_call.1} parent=0 // pred_region
    _
  $region21: #{tpu_custom_call.1} parent=0 // pred_fallthru
    _
  // Predicated region
  $region22: #{tpu_custom_call.1} parent=0 // pred_check
    _
  $region23: #{tpu_custom_call.1} parent=0 // pred_check_branch
    %31 = sbr.rel (0) target = $region25
  $region24: #{tpu_custom_call.1} parent=0 // pred_region
    _
  $region25: #{tpu_custom_call.1} parent=0 // pred_fallthru
    _
  // Predicated region
  $region26: #{tpu_custom_call.1} parent=0 // pred_check
    _
  $region27: #{tpu_custom_call.1} parent=0 // pred_check_branch
    %33 = sbr.rel (0) target = $region29
  $region28: #{tpu_custom_call.1} parent=0 // pred_region
    _
  $region29: #{tpu_custom_call.1} parent=0 // pred_fallthru
    _
  // Predicated region
  $region30: #{tpu_custom_call.1} parent=0 // pred_check
    _
  $region31: #{tpu_custom_call.1} parent=0 // pred_check_branch
    %35 = sbr.rel (0) target = $region33
  $region32: #{tpu_custom_call.1} parent=0 // pred_region
    _
  $region33: #{tpu_custom_call.1} parent=0 // pred_fallthru
    _
  // Predicated region
  $region34: #{tpu_custom_call.1} parent=0 // pred_check
    _
  $region35: #{tpu_custom_call.1} parent=0 // pred_check_branch
    %37 = sbr.rel (0) target = $region37
  $region36: #{tpu_custom_call.1} parent=0 // pred_region
    _
  $region37: #{tpu_custom_call.1} parent=0 // pred_fallthru
    _
  // Predicated region
  $region38: #{tpu_custom_call.1} parent=0 // pred_check
    _
  $region39: #{tpu_custom_call.1} parent=0 // pred_check_branch
    %39 = sbr.rel (0) target = $region41
  $region40: #{tpu_custom_call.1} parent=0 // pred_region
    _
  $region41: #{tpu_custom_call.1} parent=0 // pred_fallthru
    _
  // Predicated region
  $region42: #{tpu_custom_call.1} parent=0 // pred_check
    _
  $region43: #{tpu_custom_call.1} parent=0 // pred_check_branch
    %41 = sbr.rel (0) target = $region45
  $region44: #{tpu_custom_call.1} parent=0 // pred_region
    _
  $region45: #{tpu_custom_call.1} parent=0 // pred_fallthru
    _
  // Predicated region
  $region46: #{tpu_custom_call.1} parent=0 // pred_check
    _
  $region47: #{tpu_custom_call.1} parent=0 // pred_check_branch
    %43 = sbr.rel (0) target = $region49
  $region48: #{tpu_custom_call.1} parent=0 // pred_region
    _
  $region49: #{tpu_custom_call.1} parent=0 // pred_fallthru
    _
  // Predicated region
  $region50: #{tpu_custom_call.1} parent=0 // pred_check
    _
  $region51: #{tpu_custom_call.1} parent=0 // pred_check_branch
    %45 = sbr.rel (0) target = $region53
  $region52: #{tpu_custom_call.1} parent=0 // pred_region
    _
  $region53: #{tpu_custom_call.1} parent=0 // pred_fallthru
    _
  %v46 = vld [vmem:[%s0] sm:$0xff]
  %v47 = vld [vmem:[%s1] sm:$0xff]
  %v48 = vld [vmem:[%s1 + $0x8] sm:$0xff]
  %v49 = vld [vmem:[%s1 + $0x10] sm:$0xff]
  %v50 = vld [vmem:[%s1 + $0x18] sm:$0xff]
  %v51 = vld [vmem:[%s2] sm:$0x3]
  %v53 = vlaneseq
  %v54 = vshrl.u32 %v53, 7
  %v55 = vsub.s32 0, %v54
  %v56 = vrot.slane %v51, %v55
  %v57 = vlaneseq
  %v58 = vshrl.u32 %v57, 7
  %v59 = vsub.s32 1, %v58
  %v60 = vrot.slane %v51, %v59
  %vm63 = vcmask 130048
  %v65 = vsel %vm63, %v46, 0
  %67 = vmatprep.subr.mxu0 %v48
  %68 = vmatpush1.msra.mxu0 %v47
  %69 = vmatprep.subr.mxu0 %v50
  %70 = vmatpush1.msra.mxu0 %v49
  %71 = vmatprep.subr.mxu0 0.0
  %72 = vmatpush1.msra.mxu0 0.0
  %73 = vmatprep.subr.mxu0 0.0
  %74 = vmatpush1.msra.mxu0 0.0
  %75 = vmatprep.subr.mxu0 0.0
  %76 = vmatpush1.msra.mxu0 0.0
  %77 = vmatprep.subr.mxu0 0.0
  %78 = vmatpush1.msra.mxu0 0.0
  %79 = vmatprep.subr.mxu0 0.0
  %80 = vmatpush1.msra.mxu0 0.0
  %81 = vmatprep.subr.mxu0 0.0
  %82 = vmatpush1.msra.mxu0 0.0
  %83 = vmatprep.subr.mxu0 0.0
  %84 = vmatpush1.msra.mxu0 0.0
  %85 = vmatprep.subr.mxu0 0.0
  %86 = vmatpush1.msra.mxu0 0.0
  %87 = vmatprep.subr.mxu0 0.0
  %88 = vmatpush1.msra.mxu0 0.0
  %89 = vmatprep.subr.mxu0 0.0
  %90 = vmatpush1.msra.mxu0 0.0
  %91 = vmatprep.subr.mxu0 0.0
  %92 = vmatpush1.msra.mxu0 0.0
  %93 = vmatprep.subr.mxu0 0.0
  %94 = vmatpush1.msra.mxu0 0.0
  %95 = vmatprep.subr.mxu0 0.0
  %96 = vmatpush1.msra.mxu0 0.0
  %97 = vmatprep.subr.mxu0 0.0
  %98 = vmatpush1.msra.mxu0 0.0
  %99 = vmatprep.subr.mxu0 0.0
  %100 = vmatpush1.msra.mxu0 0.0
  %101 = vmatprep.subr.mxu0 0.0
  %102 = vmatpush1.msra.mxu0 0.0
  %103 = vmatprep.subr.mxu0 0.0
  %104 = vmatpush1.msra.mxu0 0.0
  %105 = vmatprep.subr.mxu0 0.0
  %106 = vmatpush1.msra.mxu0 0.0
  %107 = vmatprep.subr.mxu0 0.0
  %108 = vmatpush1.msra.mxu0 0.0
  %109 = vmatprep.subr.mxu0 0.0
  %110 = vmatpush1.msra.mxu0 0.0
  %111 = vmatprep.subr.mxu0 0.0
  %112 = vmatpush1.msra.mxu0 0.0
  %113 = vmatprep.subr.mxu0 0.0
  %114 = vmatpush1.msra.mxu0 0.0
  %115 = vmatprep.subr.mxu0 0.0
  %116 = vmatpush1.msra.mxu0 0.0
  %117 = vmatprep.subr.mxu0 0.0
  %118 = vmatpush1.msra.mxu0 0.0
  %119 = vmatprep.subr.mxu0 0.0
  %120 = vmatpush1.msra.mxu0 0.0
  %121 = vmatprep.subr.mxu0 0.0
  %122 = vmatpush1.msra.mxu0 0.0
  %123 = vmatprep.subr.mxu0 0.0
  %124 = vmatpush1.msra.mxu0 0.0
  %125 = vmatprep.subr.mxu0 0.0
  %126 = vmatpush1.msra.mxu0 0.0
  %127 = vmatprep.subr.mxu0 0.0
  %128 = vmatpush1.msra.mxu0 0.0
  %129 = vmatprep.subr.mxu0 0.0
  %130 = vmatpush1.msra.mxu0 0.0
  %131 = vmatprep.mubr.f32.mxu0 0.0
  %132 = vmatmul.mubr.f32.gmra.mrb[0].mxu0 %v65
  %v133 = vpop.f32.mrb[0].mxu0
  %v134 = vadd.f32 %v56, %v133
  %v135 = vpop.f32.mrb[0].mxu0
  %v136 = vadd.f32 %v60, %v135
  %137 = vdwg.mxu0
  %v138 = vmax.f32 %v134, 0.0
  %v139 = vmax.f32 %v136, 0.0
  %v140 = vld [vmem:[%s3] sm:$0xff]
  %v141 = vld [vmem:[%s3 + $0x8] sm:$0xff]
  %v142 = vld [vmem:[%s3 + $0x10] sm:$0xff]
  %v143 = vld [vmem:[%s3 + $0x18] sm:$0xff]
  %v144 = vld [vmem:[%s3 + $0x20] sm:$0xff]
  %v145 = vld [vmem:[%s3 + $0x28] sm:$0xff]
  %v146 = vld [vmem:[%s3 + $0x30] sm:$0xff]
  %v147 = vld [vmem:[%s3 + $0x38] sm:$0xff]
  %v148 = vld [vmem:[%s3 + $0x40] sm:$0xff]
  %v149 = vld [vmem:[%s3 + $0x48] sm:$0xff]
  %v150 = vld [vmem:[%s3 + $0x50] sm:$0xff]
  %v151 = vld [vmem:[%s3 + $0x58] sm:$0xff]
  %v152 = vld [vmem:[%s3 + $0x60] sm:$0xff]
  %v153 = vld [vmem:[%s3 + $0x68] sm:$0xff]
  %v154 = vld [vmem:[%s3 + $0x70] sm:$0xff]
  %v155 = vld [vmem:[%s3 + $0x78] sm:$0xff]
  %v156 = vld [vmem:[%s3 + $0x80] sm:$0xff]
  %v157 = vld [vmem:[%s3 + $0x88] sm:$0xff]
  %v158 = vld [vmem:[%s3 + $0x90] sm:$0xff]
  %v159 = vld [vmem:[%s3 + $0x98] sm:$0xff]
  %v160 = vld [vmem:[%s4] sm:$0x1]
  %v162 = vlaneseq
  %v163 = vshrl.u32 %v162, 7
  %v164 = vsub.s32 0, %v163
  %v165 = vrot.slane %v160, %v164
  %vm167 = vcmask 261120
  %v169 = vsel %vm167, %v139, 0
  %171 = vmatprep.subr.mxu0 0.0
  %172 = vmatpush1.msra.mxu0 %v140
  %173 = vmatprep.subr.mxu0 0.0
  %174 = vmatpush1.msra.mxu0 %v141
  %175 = vmatprep.subr.mxu0 0.0
  %176 = vmatpush1.msra.mxu0 %v142
  %177 = vmatprep.subr.mxu0 0.0
  %178 = vmatpush1.msra.mxu0 %v143
  %179 = vmatprep.subr.mxu0 0.0
  %180 = vmatpush1.msra.mxu0 %v144
  %181 = vmatprep.subr.mxu0 0.0
  %182 = vmatpush1.msra.mxu0 %v145
  %183 = vmatprep.subr.mxu0 0.0
  %184 = vmatpush1.msra.mxu0 %v146
  %185 = vmatprep.subr.mxu0 0.0
  %186 = vmatpush1.msra.mxu0 %v147
  %187 = vmatprep.subr.mxu0 0.0
  %188 = vmatpush1.msra.mxu0 %v148
  %189 = vmatprep.subr.mxu0 0.0
  %190 = vmatpush1.msra.mxu0 %v149
  %191 = vmatprep.subr.mxu0 0.0
  %192 = vmatpush1.msra.mxu0 %v150
  %193 = vmatprep.subr.mxu0 0.0
  %194 = vmatpush1.msra.mxu0 %v151
  %195 = vmatprep.subr.mxu0 0.0
  %196 = vmatpush1.msra.mxu0 %v152
  %197 = vmatprep.subr.mxu0 0.0
  %198 = vmatpush1.msra.mxu0 %v153
  %199 = vmatprep.subr.mxu0 0.0
  %200 = vmatpush1.msra.mxu0 %v154
  %201 = vmatprep.subr.mxu0 0.0
  %202 = vmatpush1.msra.mxu0 %v155
  %203 = vmatprep.subr.mxu0 0.0
  %204 = vmatpush1.msra.mxu0 %v156
  %205 = vmatprep.subr.mxu0 0.0
  %206 = vmatpush1.msra.mxu0 %v157
  %207 = vmatprep.subr.mxu0 0.0
  %208 = vmatpush1.msra.mxu0 %v158
  %209 = vmatprep.subr.mxu0 0.0
  %210 = vmatpush1.msra.mxu0 %v159
  %211 = vmatprep.subr.mxu0 0.0
  %212 = vmatpush1.msra.mxu0 0.0
  %213 = vmatprep.subr.mxu0 0.0
  %214 = vmatpush1.msra.mxu0 0.0
  %215 = vmatprep.subr.mxu0 0.0
  %216 = vmatpush1.msra.mxu0 0.0
  %217 = vmatprep.subr.mxu0 0.0
  %218 = vmatpush1.msra.mxu0 0.0
  %219 = vmatprep.subr.mxu0 0.0
  %220 = vmatpush1.msra.mxu0 0.0
  %221 = vmatprep.subr.mxu0 0.0
  %222 = vmatpush1.msra.mxu0 0.0
  %223 = vmatprep.subr.mxu0 0.0
  %224 = vmatpush1.msra.mxu0 0.0
  %225 = vmatprep.subr.mxu0 0.0
  %226 = vmatpush1.msra.mxu0 0.0
  %227 = vmatprep.subr.mxu0 0.0
  %228 = vmatpush1.msra.mxu0 0.0
  %229 = vmatprep.subr.mxu0 0.0
  %230 = vmatpush1.msra.mxu0 0.0
  %231 = vmatprep.subr.mxu0 0.0
  %232 = vmatpush1.msra.mxu0 0.0
  %233 = vmatprep.subr.mxu0 0.0
  %234 = vmatpush1.msra.mxu0 0.0
  %235 = vmatprep.mubr.f32.mxu0 %v169
  %236 = vmatmul.mubr.f32.gmra.mrb[0].mxu0 %v138
  %v237 = vpop.f32.mrb[0].mxu0
  %v238 = vadd.f32 %v165, %v237
  %v239 = vpop.f32.mrb[0].mxu0
  %240 = vdwg.mxu0
  %v241 = vld [vmem:[%s5] sm:$0x1]
  %v242 = vld [vmem:[%s6] sm:$0x1]
  %vm243 = vcmask 80896
  %v244 = vsel %vm243, %v238, 0.0
  %245 = vadd.xlane.f32.xlu0 %v244
  %v246 = vpop.xlane.xlu0 %245
  %v247 = vrcp.pop 10.0
  %v248 = vmul.f32 %v246, %v247
  %v249 = vsub.f32 %v238, %v248
  %v250 = vmul.f32 %v249, %v249
  %v251 = vsel %vm243, %v250, 0.0
  %252 = vadd.xlane.f32.xlu0 %v251
  %v253 = vpop.xlane.xlu0 %252
  %v254 = vmul.f32 %v253, %v247
  %v255 = vadd.f32 %v254, 1e-05
  %v256 = vrsqrt.pop %v255
  %v257 = vmul.f32 %v249, %v256
  %v259 = vlaneseq
  %v260 = vshrl.u32 %v259, 7
  %v261 = vsub.s32 0, %v260
  %v262 = vrot.slane %v241, %v261
  %v264 = vmul.f32 %v257, %v262
  %v266 = vlaneseq
  %v267 = vshrl.u32 %v266, 7
  %v268 = vsub.s32 0, %v267
  %v269 = vrot.slane %v242, %v268
  %v271 = vadd.f32 %v264, %v269
  %v272 = vmax.f32 %v271, 0.0
  %v273 = vld [vmem:[%s7] sm:$0xff]
  %v274 = vld [vmem:[%s7 + $0x8] sm:$0x3]
  %v275 = vld [vmem:[%s8] sm:$0x1]
  %v277 = vlaneseq
  %v278 = vshrl.u32 %v277, 7
  %v279 = vsub.s32 0, %v278
  %v280 = vrot.slane %v275, %v279
  %v283 = vsel %vm243, %v272, 0
  %vm285 = vcmask 1041408
  %v287 = vsel %vm285, %v274, 0
  %289 = vmatprep.subr.mxu0 0.0
  %290 = vmatpush1.msra.mxu0 %v273
  %291 = vmatprep.subr.mxu0 0.0
  %292 = vmatpush1.msra.mxu0 %v287
  %293 = vmatprep.subr.mxu0 0.0
  %294 = vmatpush1.msra.mxu0 0.0
  %295 = vmatprep.subr.mxu0 0.0
  %296 = vmatpush1.msra.mxu0 0.0
  %297 = vmatprep.subr.mxu0 0.0
  %298 = vmatpush1.msra.mxu0 0.0
  %299 = vmatprep.subr.mxu0 0.0
  %300 = vmatpush1.msra.mxu0 0.0
  %301 = vmatprep.subr.mxu0 0.0
  %302 = vmatpush1.msra.mxu0 0.0
  %303 = vmatprep.subr.mxu0 0.0
  %304 = vmatpush1.msra.mxu0 0.0
  %305 = vmatprep.subr.mxu0 0.0
  %306 = vmatpush1.msra.mxu0 0.0
  %307 = vmatprep.subr.mxu0 0.0
  %308 = vmatpush1.msra.mxu0 0.0
  %309 = vmatprep.subr.mxu0 0.0
  %310 = vmatpush1.msra.mxu0 0.0
  %311 = vmatprep.subr.mxu0 0.0
  %312 = vmatpush1.msra.mxu0 0.0
  %313 = vmatprep.subr.mxu0 0.0
  %314 = vmatpush1.msra.mxu0 0.0
  %315 = vmatprep.subr.mxu0 0.0
  %316 = vmatpush1.msra.mxu0 0.0
  %317 = vmatprep.subr.mxu0 0.0
  %318 = vmatpush1.msra.mxu0 0.0
  %319 = vmatprep.subr.mxu0 0.0
  %320 = vmatpush1.msra.mxu0 0.0
  %321 = vmatprep.subr.mxu0 0.0
  %322 = vmatpush1.msra.mxu0 0.0
  %323 = vmatprep.subr.mxu0 0.0
  %324 = vmatpush1.msra.mxu0 0.0
  %325 = vmatprep.subr.mxu0 0.0
  %326 = vmatpush1.msra.mxu0 0.0
  %327 = vmatprep.subr.mxu0 0.0
  %328 = vmatpush1.msra.mxu0 0.0
  %329 = vmatprep.subr.mxu0 0.0
  %330 = vmatpush1.msra.mxu0 0.0
  %331 = vmatprep.subr.mxu0 0.0
  %332 = vmatpush1.msra.mxu0 0.0
  %333 = vmatprep.subr.mxu0 0.0
  %334 = vmatpush1.msra.mxu0 0.0
  %335 = vmatprep.subr.mxu0 0.0
  %336 = vmatpush1.msra.mxu0 0.0
  %337 = vmatprep.subr.mxu0 0.0
  %338 = vmatpush1.msra.mxu0 0.0
  %339 = vmatprep.subr.mxu0 0.0
  %340 = vmatpush1.msra.mxu0 0.0
  %341 = vmatprep.subr.mxu0 0.0
  %342 = vmatpush1.msra.mxu0 0.0
  %343 = vmatprep.subr.mxu0 0.0
  %344 = vmatpush1.msra.mxu0 0.0
  %345 = vmatprep.subr.mxu0 0.0
  %346 = vmatpush1.msra.mxu0 0.0
  %347 = vmatprep.subr.mxu0 0.0
  %348 = vmatpush1.msra.mxu0 0.0
  %349 = vmatprep.subr.mxu0 0.0
  %350 = vmatpush1.msra.mxu0 0.0
  %351 = vmatprep.subr.mxu0 0.0
  %352 = vmatpush1.msra.mxu0 0.0
  %353 = vmatprep.mubr.f32.mxu0 0.0
  %354 = vmatmul.mubr.f32.gmra.mrb[0].mxu0 %v283
  %v355 = vpop.f32.mrb[0].mxu0
  %v356 = vadd.f32 %v280, %v355
  %v357 = vpop.f32.mrb[0].mxu0
  %358 = vdwg.mxu0
  %v359 = vld [vmem:[%s9] sm:$0x1]
  %v360 = vld [vmem:[%s10] sm:$0x1]
  %v361 = vsel %vm243, %v356, 0.0
  %362 = vadd.xlane.f32.xlu0 %v361
  %v363 = vpop.xlane.xlu0 %362
  %v364 = vmul.f32 %v363, %v247
  %v365 = vsub.f32 %v356, %v364
  %v366 = vmul.f32 %v365, %v365
  %v367 = vsel %vm243, %v366, 0.0
  %368 = vadd.xlane.f32.xlu0 %v367
  %v369 = vpop.xlane.xlu0 %368
  %v370 = vmul.f32 %v369, %v247
  %v371 = vadd.f32 %v370, 1e-05
  %v372 = vrsqrt.pop %v371
  %v373 = vmul.f32 %v365, %v372
  %v375 = vlaneseq
  %v376 = vshrl.u32 %v375, 7
  %v377 = vsub.s32 0, %v376
  %v378 = vrot.slane %v359, %v377
  %v380 = vmul.f32 %v373, %v378
  %v382 = vlaneseq
  %v383 = vshrl.u32 %v382, 7
  %v384 = vsub.s32 0, %v383
  %v385 = vrot.slane %v360, %v384
  %v387 = vadd.f32 %v380, %v385
  %v388 = vmax.f32 %v387, 0.0
  %v389 = vld [vmem:[%s11] sm:$0x1]
  %v391 = vlaneseq
  %v392 = vshrl.u32 %v391, 7
  %v393 = vsub.s32 0, %v392
  %v394 = vrot.slane %v389, %v393
  %v396 = vmul.f32 %v388, %v394
  %v397 = vsel %vm243, %v396, 0.0
  %398 = vadd.xlane.f32.xlu0 %v397
  %v399 = vpop.xlane.xlu0 %398
  %v400 = vld [vmem:[#allocation2] sm:$0x1]
  %v402 = vlaneseq
  %v403 = vshrl.u32 %v402, 7
  %v404 = vsub.s32 0, %v403
  %v405 = vrot.slane %v400, %v404
  %v407 = vadd.f32 %v399, %v405
  %vm408 = vcmask 7168
  %409 = vst.msk [vmem:[%s13] sm:$0xff] %vm408, %v407
  // Predicated region
  $region54: #{tpu_custom_call.1} parent=0 // pred_check
    _
  $region55: #{tpu_custom_call.1} parent=0 // pred_check_branch
    %411 = sbr.rel (0) target = $region57
  $region56: #{tpu_custom_call.1} parent=0 // pred_region
    _
  $region57: #{tpu_custom_call.1} parent=0 // pred_fallthru
    _
  // Predicated region
  $region58: #{tpu_custom_call.1} parent=0 // pred_check
    _
  $region59: #{tpu_custom_call.1} parent=0 // pred_check_branch
    %413 = sbr.rel (0) target = $region61
  $region60: #{tpu_custom_call.1} parent=0 // pred_region
    _
  $region61: #{tpu_custom_call.1} parent=0 // pred_fallthru
    _

</llo_original>
